<compile_context>
chip_gen: v7x
topology: tpu7x:2x2x1
jax: 0.10.0
libtpu: 0.0.40
codegen_flags: <defaults>
</compile_context>

<pallas_src>
import functools

import jax
import jax.numpy as jnp
from jax import lax
from jax.experimental import pallas as pl
from jax.experimental.pallas import tpu as pltpu

LANES = 128          # lane width of a vreg; slab widths are multiples of this
NEG_BIG = -1e30      # "minus infinity" for masked (padded) logit lanes


def _round_up(x, m):
    return (x + m - 1) // m * m


def _head_kernel(nhid, num_classes,
                 x_ref,
                 w13_ref, b13_ref,
                 w24_ref, b24_ref,
                 w5_ref, b5_ref,
                 out_ref):
    x = x_ref[...]                                              # [TB, 2*nhid] bf16

    # Layer 1 (fused lin1 | lin3): both branches consume before_fc and apply ReLU.
    h1 = jnp.dot(x, w13_ref[...],
                 preferred_element_type=jnp.float32) + b13_ref[...]   # [TB, H]
    h1 = jnp.maximum(h1, 0.0)
    # dropout (eval mode) == identity

    # Layer 2 (block-diagonal lin2 (+) lin4):
    #   lanes [0, nhid)       -> feature output (lin2)
    #   lanes [nhid, 2*nhid)  -> classifier hidden (lin4, no ReLU per the module)
    h2 = jnp.dot(h1.astype(jnp.bfloat16), w24_ref[...],
                 preferred_element_type=jnp.float32) + b24_ref[...]   # [TB, H]

    # Layer 3 (lin5): weight rows outside [nhid, 2*nhid) are zero, so only the
    # classifier half contributes; logits land directly on lanes [nhid, nhid+C).
    logits = jnp.dot(h2.astype(jnp.bfloat16), w5_ref[...],
                     preferred_element_type=jnp.float32) + b5_ref[...]  # [TB, H]

    col = lax.broadcasted_iota(jnp.int32, logits.shape, 1)
    valid = jnp.logical_and(col >= nhid, col < nhid + num_classes)
    logits = jnp.where(valid, logits, NEG_BIG)

    # Numerically stable log_softmax over the masked lane range.
    m = jnp.max(logits, axis=-1, keepdims=True)
    shifted = logits - m
    lse = jnp.log(jnp.sum(jnp.exp(shifted), axis=-1, keepdims=True))
    logp = shifted - lse                                        # [TB, H]

    # Packed output: feature output in lanes [0, nhid), log-probs in
    # [nhid, nhid+C); remaining lanes are don't-care padding.
    out_ref[...] = jnp.where(col < nhid, h2, logp).astype(out_ref.dtype)


def prepare_head_params(params):
    """One-time prep: fuse/pad/cast the five Linear layers into three bf16 weights.

    params: (w1,b1,...,w5,b5) with weights stored [in, out], biases [1, out].
    """
    w1, b1, w2, b2, w3, b3, w4, b4, w5, b5 = params
    d_in, nhid = w1.shape
    num_classes = w5.shape[1]
    H = _round_up(2 * nhid, LANES)
    assert nhid + num_classes <= H, "packed output requires nhid + C <= round_up(2*nhid,128)"
    assert d_in == 2 * nhid, "Model_joint head expects before_fc of width 2*nhid"

    bf16 = jnp.bfloat16
    f32 = jnp.float32

    # W13 = [lin1 | lin3] -> [d_in, H]
    w13 = jnp.zeros((d_in, H), bf16)
    w13 = w13.at[:, :nhid].set(w1.astype(bf16))
    w13 = w13.at[:, nhid:2 * nhid].set(w3.astype(bf16))
    b13 = jnp.zeros((1, H), f32).at[:, :nhid].set(b1).at[:, nhid:2 * nhid].set(b3)

    # W24 = blockdiag(lin2, lin4) -> [H, H]
    w24 = jnp.zeros((H, H), bf16)
    w24 = w24.at[:nhid, :nhid].set(w2.astype(bf16))
    w24 = w24.at[nhid:2 * nhid, nhid:2 * nhid].set(w4.astype(bf16))
    b24 = jnp.zeros((1, H), f32).at[:, :nhid].set(b2).at[:, nhid:2 * nhid].set(b4)

    # W5p: rows [nhid, 2*nhid) hold lin5; output columns [nhid, nhid+C).
    w5p = jnp.zeros((H, H), bf16)
    w5p = w5p.at[nhid:2 * nhid, nhid:nhid + num_classes].set(w5.astype(bf16))
    b5p = jnp.zeros((1, H), f32).at[:, nhid:nhid + num_classes].set(b5)

    return dict(nhid=nhid, num_classes=num_classes, d_in=d_in, H=H,
                fused=(w13, b13, w24, b24, w5p, b5p))


def model_joint_head_forward(before_fc, prepared, *, block_rows=2048):
    """Dense head of Model_joint (eval mode).

    before_fc: [B, 2*nhid] f32 graph-readout features.
    prepared:  output of prepare_head_params(params).
    Returns (x, x_cls) = ([B, nhid] f32, [B, num_classes] f32 log-probs).
    """
    nhid = prepared["nhid"]
    num_classes = prepared["num_classes"]
    d_in = prepared["d_in"]
    H = prepared["H"]
    w13, b13, w24, b24, w5p, b5p = prepared["fused"]

    B = before_fc.shape[0]
    assert before_fc.shape[1] == d_in

    x = before_fc.astype(jnp.bfloat16)

    # Row tiling: multiple of 16 (bf16 sublane packing); big tiles amortize the
    # ~0.35 us/step grid overhead; keep >= 2 grid steps when the batch allows it
    # so both v7x TensorCores get work ("parallel" grid axis).
    TB = min(block_rows, _round_up(B, 16))
    if B > 16:
        TB = min(TB, _round_up((B + 1) // 2, 16))
    Bp = _round_up(B, TB)
    if Bp != B:
        x = jnp.pad(x, ((0, Bp - B), (0, 0)))
    grid = (Bp // TB,)

    # Tiny weights stay VMEM-resident (constant block index => fetched once).
    resident = lambda a: pl.BlockSpec(a.shape, lambda i: (0, 0))

    weight_bytes = (w13.size + w24.size + w5p.size) * 2 \
                 + (b13.size + b24.size + b5p.size) * 4
    cost = pl.CostEstimate(
        flops=2 * Bp * (d_in * H + 2 * H * H),
        transcendentals=Bp * H,                     # exp in log_softmax
        bytes_accessed=Bp * d_in * 2 + Bp * H * 4 + weight_bytes)

    kernel = functools.partial(_head_kernel, nhid, num_classes)
    out = pl.pallas_call(
        kernel,
        out_shape=jax.ShapeDtypeStruct((Bp, H), jnp.float32),
        grid=grid,
        in_specs=[pl.BlockSpec((TB, d_in), lambda i: (i, 0)),
                  resident(w13), resident(b13),
                  resident(w24), resident(b24),
                  resident(w5p), resident(b5p)],
        out_specs=pl.BlockSpec((TB, H), lambda i: (i, 0)),
        compiler_params=pltpu.CompilerParams(
            dimension_semantics=("parallel",)),
        cost_estimate=cost,
    )(x, w13, b13, w24, b24, w5p, b5p)

    return out[:B, :nhid], out[:B, nhid:nhid + num_classes]


def init_params(key, nhid, num_classes):
    """torch.nn.Linear-style U(-1/sqrt(fan_in), +1/sqrt(fan_in)) init.

    Weights are stored transposed relative to PyTorch ([in, out])."""
    def linear(k, fan_in, fan_out):
        kw, kb = jax.random.split(k)
        bound = 1.0 / float(fan_in) ** 0.5
        w = jax.random.uniform(kw, (fan_in, fan_out), jnp.float32, -bound, bound)
        b = jax.random.uniform(kb, (1, fan_out), jnp.float32, -bound, bound)
        return w, b

    k1, k2, k3, k4, k5 = jax.random.split(key, 5)
    w1, b1 = linear(k1, 2 * nhid, nhid)          # lin1
    w2, b2 = linear(k2, nhid, nhid)              # lin2
    w3, b3 = linear(k3, 2 * nhid, nhid)          # lin3
    w4, b4 = linear(k4, nhid, nhid)              # lin4
    w5, b5 = linear(k5, nhid, num_classes)       # lin5
    return (w1, b1, w2, b2, w3, b3, w4, b4, w5, b5)


def reference_head(before_fc, params):
    """Pure-JAX reference with the same bf16-input / f32-accumulate matmuls."""
    w1, b1, w2, b2, w3, b3, w4, b4, w5, b5 = params
    bf16 = jnp.bfloat16

    def lin(h, w, b):
        return jnp.dot(h.astype(bf16), w.astype(bf16),
                       preferred_element_type=jnp.float32) + b

    h = jnp.maximum(lin(before_fc, w1, b1), 0.0)
    x_feat = lin(h, w2, b2)

    h = jnp.maximum(lin(before_fc, w3, b3), 0.0)
    h = lin(h, w4, b4)                           # NOTE: no ReLU after lin4 (matches module)
    logits = lin(h, w5, b5)
    return x_feat, jax.nn.log_softmax(logits, axis=-1)


if __name__ == "__main__":
    nhid = 32            # args.nhid
    num_classes = 8      # args.num_classes
    num_graphs = 16      # small demo "batch" of graph readout vectors

    key = jax.random.PRNGKey(0)
    kx, kp = jax.random.split(key)
    # Stand-in for before_fc = relu(x1)+relu(x2)+relu(x3)  (non-negative readout)
    before_fc = jnp.maximum(
        jax.random.normal(kx, (num_graphs, 2 * nhid), dtype=jnp.float32), 0.0)
    params = init_params(kp, nhid, num_classes)

    prepared = prepare_head_params(params)       # one-time fuse/pad/cast
    x_out, x_cls = model_joint_head_forward(before_fc, prepared)
    x_out, x_cls = jax.block_until_ready((x_out, x_cls))

    ref_x, ref_cls = reference_head(before_fc, params)
    assert x_out.shape == (num_graphs, nhid)
    assert x_cls.shape == (num_graphs, num_classes)
    assert jnp.allclose(x_out, ref_x, atol=2e-3, rtol=2e-3), "x mismatch vs reference"
    assert jnp.allclose(x_cls, ref_cls, atol=2e-3, rtol=2e-3), "x_cls mismatch vs reference"

    print("KERNEL_OK")
</pallas_src>

<mosaic_0001>
module attributes {stable_mosaic.version = 11 : i64} {
  func.func @_head_kernel(%arg0: i32, %arg1: memref<16x64xbf16, #tpu.memory_space<vmem>>, %arg2: memref<64x128xbf16, #tpu.memory_space<vmem>>, %arg3: memref<1x128xf32, #tpu.memory_space<vmem>>, %arg4: memref<128x128xbf16, #tpu.memory_space<vmem>>, %arg5: memref<1x128xf32, #tpu.memory_space<vmem>>, %arg6: memref<128x128xbf16, #tpu.memory_space<vmem>>, %arg7: memref<1x128xf32, #tpu.memory_space<vmem>>, %arg8: memref<16x128xf32, #tpu.memory_space<vmem>>) attributes {dimension_semantics = [#tpu.dimension_semantics<parallel>], iteration_bounds = array<i64: 1>, scalar_prefetch = 0 : i64, scratch_operands = 0 : i64, tpu.core_type = #tpu.core_type<tc>, window_params = [{transform_indices = @transform_0, window_bounds = array<i64: 16, 64>}, {pipeline_mode = #tpu.pipeline_mode<synchronous>, transform_indices = @transform_1, window_bounds = array<i64: 64, 128>}, {pipeline_mode = #tpu.pipeline_mode<synchronous>, transform_indices = @transform_2, window_bounds = array<i64: 1, 128>}, {pipeline_mode = #tpu.pipeline_mode<synchronous>, transform_indices = @transform_3, window_bounds = array<i64: 128, 128>}, {pipeline_mode = #tpu.pipeline_mode<synchronous>, transform_indices = @transform_4, window_bounds = array<i64: 1, 128>}, {pipeline_mode = #tpu.pipeline_mode<synchronous>, transform_indices = @transform_5, window_bounds = array<i64: 128, 128>}, {pipeline_mode = #tpu.pipeline_mode<synchronous>, transform_indices = @transform_6, window_bounds = array<i64: 1, 128>}, {transform_indices = @transform_7, window_bounds = array<i64: 16, 128>}]} {
    %c0 = arith.constant 0 : index
    %c0_0 = arith.constant 0 : index
    %0 = vector.load %arg1[%c0, %c0_0] : memref<16x64xbf16, #tpu.memory_space<vmem>>, vector<16x64xbf16>
    %c0_1 = arith.constant 0 : index
    %c0_2 = arith.constant 0 : index
    %1 = vector.load %arg2[%c0_1, %c0_2] : memref<64x128xbf16, #tpu.memory_space<vmem>>, vector<64x128xbf16>
    %cst = arith.constant dense<0.000000e+00> : vector<16x128xf32>
    %2 = tpu.matmul %0, %1, %cst {dimension_numbers = #tpu.dot_dimension_numbers<[1], [0], [0], [1], [0, 0, 1, 1], [], []>} : vector<16x64xbf16>, vector<64x128xbf16>, vector<16x128xf32> -> vector<16x128xf32>
    %c0_3 = arith.constant 0 : index
    %c0_4 = arith.constant 0 : index
    %3 = vector.load %arg3[%c0_3, %c0_4] : memref<1x128xf32, #tpu.memory_space<vmem>>, vector<1x128xf32>
    %4 = vector.broadcast %3 : vector<1x128xf32> to vector<16x128xf32>
    %5 = arith.addf %2, %4 : vector<16x128xf32>
    %cst_5 = arith.constant 0.000000e+00 : f32
    %6 = vector.broadcast %cst_5 : f32 to vector<16x128xf32>
    %7 = arith.maximumf %5, %6 : vector<16x128xf32>
    %8 = arith.truncf %7 : vector<16x128xf32> to vector<16x128xbf16>
    %c0_6 = arith.constant 0 : index
    %c0_7 = arith.constant 0 : index
    %9 = vector.load %arg4[%c0_6, %c0_7] : memref<128x128xbf16, #tpu.memory_space<vmem>>, vector<128x128xbf16>
    %cst_8 = arith.constant dense<0.000000e+00> : vector<16x128xf32>
    %10 = tpu.matmul %8, %9, %cst_8 {dimension_numbers = #tpu.dot_dimension_numbers<[1], [0], [0], [1], [0, 0, 1, 1], [], []>} : vector<16x128xbf16>, vector<128x128xbf16>, vector<16x128xf32> -> vector<16x128xf32>
    %c0_9 = arith.constant 0 : index
    %c0_10 = arith.constant 0 : index
    %11 = vector.load %arg5[%c0_9, %c0_10] : memref<1x128xf32, #tpu.memory_space<vmem>>, vector<1x128xf32>
    %12 = vector.broadcast %11 : vector<1x128xf32> to vector<16x128xf32>
    %13 = arith.addf %10, %12 : vector<16x128xf32>
    %14 = arith.truncf %13 : vector<16x128xf32> to vector<16x128xbf16>
    %c0_11 = arith.constant 0 : index
    %c0_12 = arith.constant 0 : index
    %15 = vector.load %arg6[%c0_11, %c0_12] : memref<128x128xbf16, #tpu.memory_space<vmem>>, vector<128x128xbf16>
    %cst_13 = arith.constant dense<0.000000e+00> : vector<16x128xf32>
    %16 = tpu.matmul %14, %15, %cst_13 {dimension_numbers = #tpu.dot_dimension_numbers<[1], [0], [0], [1], [0, 0, 1, 1], [], []>} : vector<16x128xbf16>, vector<128x128xbf16>, vector<16x128xf32> -> vector<16x128xf32>
    %c0_14 = arith.constant 0 : index
    %c0_15 = arith.constant 0 : index
    %17 = vector.load %arg7[%c0_14, %c0_15] : memref<1x128xf32, #tpu.memory_space<vmem>>, vector<1x128xf32>
    %18 = vector.broadcast %17 : vector<1x128xf32> to vector<16x128xf32>
    %19 = arith.addf %16, %18 : vector<16x128xf32>
    %20 = tpu.iota {dimensions = array<i32: 1>} : vector<16x128xi32>
    %c32_i32 = arith.constant 32 : i32
    %21 = vector.broadcast %c32_i32 : i32 to vector<16x128xi32>
    %22 = arith.cmpi sge, %20, %21 : vector<16x128xi32>
    %c40_i32 = arith.constant 40 : i32
    %23 = vector.broadcast %c40_i32 : i32 to vector<16x128xi32>
    %24 = arith.cmpi slt, %20, %23 : vector<16x128xi32>
    %25 = arith.andi %22, %24 : vector<16x128xi1>
    %cst_16 = arith.constant -1.000000e+30 : f32
    %26 = vector.broadcast %cst_16 : f32 to vector<16x128xf32>
    %27 = arith.select %25, %19, %26 : vector<16x128xi1>, vector<16x128xf32>
    %cst_17 = arith.constant dense<0xFF800000> : vector<16xf32>
    %28 = vector.multi_reduction <maximumf>, %27, %cst_17 [1] : vector<16x128xf32> to vector<16xf32>
    %29 = vector.shape_cast %28 : vector<16xf32> to vector<16x1xf32>
    %30 = vector.broadcast %29 : vector<16x1xf32> to vector<16x128xf32>
    %31 = arith.subf %27, %30 : vector<16x128xf32>
    %32 = math.exp %31 : vector<16x128xf32>
    %cst_18 = arith.constant dense<0.000000e+00> : vector<16xf32>
    %33 = vector.multi_reduction <add>, %32, %cst_18 [1] : vector<16x128xf32> to vector<16xf32>
    %34 = vector.shape_cast %33 : vector<16xf32> to vector<16x1xf32>
    %35 = math.log %34 : vector<16x1xf32>
    %36 = vector.broadcast %35 : vector<16x1xf32> to vector<16x128xf32>
    %37 = arith.subf %31, %36 : vector<16x128xf32>
    %c32_i32_19 = arith.constant 32 : i32
    %38 = vector.broadcast %c32_i32_19 : i32 to vector<16x128xi32>
    %39 = arith.cmpi slt, %20, %38 : vector<16x128xi32>
    %40 = arith.select %39, %13, %37 : vector<16x128xi1>, vector<16x128xf32>
    %c0_20 = arith.constant 0 : index
    %c0_21 = arith.constant 0 : index
    %41 = vector.load %arg8[%c0_20, %c0_21] : memref<16x128xf32, #tpu.memory_space<vmem>>, vector<16x128xf32>
    tpu.vector_store %arg8[%c0_20, %c0_21], %40 {strides = array<i32>} : memref<16x128xf32, #tpu.memory_space<vmem>>, vector<16x128xf32>,
    return
  }
  func.func @transform_0(%arg0: i32) -> (i32, i32) {
    %c0_i32 = arith.constant 0 : i32
    %c0_i32_0 = arith.constant 0 : i32
    return %arg0, %c0_i32 : i32, i32
  }
  func.func @transform_1(%arg0: i32) -> (i32, i32) {
    %c0_i32 = arith.constant 0 : i32
    %c0_i32_0 = arith.constant 0 : i32
    %c0_i32_1 = arith.constant 0 : i32
    return %c0_i32, %c0_i32_0 : i32, i32
  }
  func.func @transform_2(%arg0: i32) -> (i32, i32) {
    %c0_i32 = arith.constant 0 : i32
    %c0_i32_0 = arith.constant 0 : i32
    %c0_i32_1 = arith.constant 0 : i32
    return %c0_i32, %c0_i32_0 : i32, i32
  }
  func.func @transform_3(%arg0: i32) -> (i32, i32) {
    %c0_i32 = arith.constant 0 : i32
    %c0_i32_0 = arith.constant 0 : i32
    %c0_i32_1 = arith.constant 0 : i32
    return %c0_i32, %c0_i32_0 : i32, i32
  }
  func.func @transform_4(%arg0: i32) -> (i32, i32) {
    %c0_i32 = arith.constant 0 : i32
    %c0_i32_0 = arith.constant 0 : i32
    %c0_i32_1 = arith.constant 0 : i32
    return %c0_i32, %c0_i32_0 : i32, i32
  }
  func.func @transform_5(%arg0: i32) -> (i32, i32) {
    %c0_i32 = arith.constant 0 : i32
    %c0_i32_0 = arith.constant 0 : i32
    %c0_i32_1 = arith.constant 0 : i32
    return %c0_i32, %c0_i32_0 : i32, i32
  }
  func.func @transform_6(%arg0: i32) -> (i32, i32) {
    %c0_i32 = arith.constant 0 : i32
    %c0_i32_0 = arith.constant 0 : i32
    %c0_i32_1 = arith.constant 0 : i32
    return %c0_i32, %c0_i32_0 : i32, i32
  }
  func.func @transform_7(%arg0: i32) -> (i32, i32) {
    %c0_i32 = arith.constant 0 : i32
    %c0_i32_0 = arith.constant 0 : i32
    return %arg0, %c0_i32 : i32, i32
  }
}

</mosaic_0001>

<llo_original>
// kernel: tpu_custom_call.1
$region0: #{tpu_custom_call.1}
  #allocation0 [shape = 'u32[]', space=smem, size = 0x4, offset = 0x4, fixed_abs, tag = 'smem constant byte address 0x4 - core index']
  #allocation1 [shape = 'u32[144,128]{1,0:T(1,128)}', space=vmem, size = 0x12000, scoped, tag = 'internal scratch']
  %s0 = inlined_call_operand.hbm [shape: bf16[16,64], index: 0, kind: input, shape index: {}]
  %s1 = inlined_call_operand.hbm [shape: bf16[64,128], index: 1, kind: input, shape index: {}]
  %s2 = inlined_call_operand.vmem [shape: f32[1,128], index: 2, kind: input, shape index: {}]
  %s3 = inlined_call_operand.hbm [shape: bf16[128,128], index: 3, kind: input, shape index: {}]
  %s4 = inlined_call_operand.vmem [shape: f32[1,128], index: 4, kind: input, shape index: {}]
  %s5 = inlined_call_operand.hbm [shape: bf16[128,128], index: 5, kind: input, shape index: {}]
  %s6 = inlined_call_operand.vmem [shape: f32[1,128], index: 6, kind: input, shape index: {}]
  %s7 = inlined_call_operand.hbm [shape: f32[16,128], index: 7, kind: output, shape index: {}]
  %s8 = sld [smem:[#allocation0]]
  $region54: #{tpu_custom_call.1} parent=0
    _
  %s10 = ssub.s32 1, %s8
  %s11 = scalar_select 0, %s10, %s8
  $region1: #{tpu_custom_call.1} parent=0
    #allocation2 [shape = 'u8[4096]{0}', space=vmem, size = 0x1000, scoped, tag = 'input window, operand 0, single buffered']
    #allocation3 [shape = 's32[1]{0}', space=sflag, size = 0x4, scoped, tag = 'scoped memory for tpu_custom_call.1']
    #allocation4 [shape = 's32[1]{0}', space=sflag, size = 0x4, scoped, tag = 'scoped memory for tpu_custom_call.1']
    #allocation5 [shape = 'u8[16384]{0}', space=vmem, size = 0x4000, scoped, tag = 'input window, operand 1, single buffered']
    #allocation6 [shape = 's32[1]{0}', space=sflag, size = 0x4, scoped, tag = 'scoped memory for tpu_custom_call.1']
    #allocation7 [shape = 'u8[32768]{0}', space=vmem, size = 0x8000, scoped, tag = 'input window, operand 3, single buffered']
    #allocation8 [shape = 'u8[32768]{0}', space=vmem, size = 0x8000, scoped, tag = 'input window, operand 5, single buffered']
    #allocation9 [shape = 's32[1]{0}', space=sflag, size = 0x4, scoped, tag = 'scoped memory for tpu_custom_call.1']
    #allocation10 [shape = 'u8[8192]{0}', space=vmem, size = 0x2000, scoped, tag = 'output window, operand 0, single buffered']
    %12 = vsyncpa [#allocation3], 0
    %13 = vsyncpa [#allocation6], 0
    %14 = vsyncpa [#allocation9], 0
    %15 = vsyncpa [#allocation4], 0
    // Predicated region
    $region2: #{tpu_custom_call.1} parent=1 // pred_check
      _
    $region3: #{tpu_custom_call.1} parent=1 // pred_check_branch
      %17 = sbr.rel (0) target = $region5
    $region4: #{tpu_custom_call.1} parent=1 // pred_region
      %s19 = ssub.s32 128, 128
      %20 = vsyncadd [#allocation3], %s19
      %s21 = sshll.u32 [#allocation2], 4
      %s22 = int_to_ptr.vmem [resolvable:$true] %s21
      %27 = dma.hbm_to_vmem [thread:$0]  %s0, 128, %s22, [#allocation3], 64, 64, 4
    $region5: #{tpu_custom_call.1} parent=1 // pred_fallthru
      _
    // Predicated region
    $region6: #{tpu_custom_call.1} parent=1 // pred_check
      _
    $region7: #{tpu_custom_call.1} parent=1 // pred_check_branch
      %29 = sbr.rel (0) target = $region9
    $region8: #{tpu_custom_call.1} parent=1 // pred_region
      %s31 = ssub.s32 512, 512
      %32 = vsyncadd [#allocation6], %s31
      %s33 = sshll.u32 [#allocation5], 4
      %s34 = int_to_ptr.vmem [resolvable:$true] %s33
      %39 = dma.hbm_to_vmem [thread:$0]  %s1, 512, %s34, [#allocation6], 64, 64, 4
    $region9: #{tpu_custom_call.1} parent=1 // pred_fallthru
      _
    // Predicated region
    $region10: #{tpu_custom_call.1} parent=1 // pred_check
      _
    $region11: #{tpu_custom_call.1} parent=1 // pred_check_branch
      %41 = sbr.rel (0) target = $region13
    $region12: #{tpu_custom_call.1} parent=1 // pred_region
      _
    $region13: #{tpu_custom_call.1} parent=1 // pred_fallthru
      _
    // Predicated region
    $region14: #{tpu_custom_call.1} parent=1 // pred_check
      _
    $region15: #{tpu_custom_call.1} parent=1 // pred_check_branch
      %43 = sbr.rel (0) target = $region17
    $region16: #{tpu_custom_call.1} parent=1 // pred_region
      %s45 = ssub.s32 1024, 1024
      %46 = vsyncadd [#allocation6], %s45
      %s47 = sshll.u32 [#allocation7], 4
      %s48 = int_to_ptr.vmem [resolvable:$true] %s47
      %53 = dma.hbm_to_vmem [thread:$0]  %s3, 1024, %s48, [#allocation6], 64, 64, 4
    $region17: #{tpu_custom_call.1} parent=1 // pred_fallthru
      _
    // Predicated region
    $region18: #{tpu_custom_call.1} parent=1 // pred_check
      _
    $region19: #{tpu_custom_call.1} parent=1 // pred_check_branch
      %55 = sbr.rel (0) target = $region21
    $region20: #{tpu_custom_call.1} parent=1 // pred_region
      _
    $region21: #{tpu_custom_call.1} parent=1 // pred_fallthru
      _
    // Predicated region
    $region22: #{tpu_custom_call.1} parent=1 // pred_check
      _
    $region23: #{tpu_custom_call.1} parent=1 // pred_check_branch
      %57 = sbr.rel (0) target = $region25
    $region24: #{tpu_custom_call.1} parent=1 // pred_region
      %s59 = ssub.s32 1024, 1024
      %60 = vsyncadd [#allocation9], %s59
      %s61 = sshll.u32 [#allocation8], 4
      %s62 = int_to_ptr.vmem [resolvable:$true] %s61
      %67 = dma.hbm_to_vmem [thread:$0]  %s5, 1024, %s62, [#allocation9], 64, 64, 4
    $region25: #{tpu_custom_call.1} parent=1 // pred_fallthru
      _
    // Predicated region
    $region26: #{tpu_custom_call.1} parent=1 // pred_check
      _
    $region27: #{tpu_custom_call.1} parent=1 // pred_check_branch
      %69 = sbr.rel (0) target = $region29
    $region28: #{tpu_custom_call.1} parent=1 // pred_region
      _
    $region29: #{tpu_custom_call.1} parent=1 // pred_fallthru
      _
    // Predicated region
    $region30: #{tpu_custom_call.1} parent=1 // pred_check
      _
    $region31: #{tpu_custom_call.1} parent=1 // pred_check_branch
      %71 = sbr.rel (0) target = $region33
    $region32: #{tpu_custom_call.1} parent=1 // pred_region
      %72 = dma.done [#allocation3], 128
    $region33: #{tpu_custom_call.1} parent=1 // pred_fallthru
      _
    // Predicated region
    $region34: #{tpu_custom_call.1} parent=1 // pred_check
      _
    $region35: #{tpu_custom_call.1} parent=1 // pred_check_branch
      %74 = sbr.rel (0) target = $region37
    $region36: #{tpu_custom_call.1} parent=1 // pred_region
      %75 = dma.done [#allocation6], 512
    $region37: #{tpu_custom_call.1} parent=1 // pred_fallthru
      _
    // Predicated region
    $region38: #{tpu_custom_call.1} parent=1 // pred_check
      _
    $region39: #{tpu_custom_call.1} parent=1 // pred_check_branch
      %77 = sbr.rel (0) target = $region41
    $region40: #{tpu_custom_call.1} parent=1 // pred_region
      %78 = dma.done [#allocation6], 1024
    $region41: #{tpu_custom_call.1} parent=1 // pred_fallthru
      _
    // Predicated region
    $region42: #{tpu_custom_call.1} parent=1 // pred_check
      _
    $region43: #{tpu_custom_call.1} parent=1 // pred_check_branch
      %80 = sbr.rel (0) target = $region45
    $region44: #{tpu_custom_call.1} parent=1 // pred_region
      %81 = dma.done [#allocation9], 1024
    $region45: #{tpu_custom_call.1} parent=1 // pred_fallthru
      _
    %v83 = vld [vmem:[#allocation2] sm:$0xf]
    %v84 = vld [vmem:[#allocation2 + $0x4] sm:$0xf]
    %v85 = vld [vmem:[#allocation5] sm:$0xf]
    %v86 = vld [vmem:[#allocation5 + $0x4] sm:$0xf]
    %v87 = vld [vmem:[#allocation5 + $0x8] sm:$0xf]
    %v88 = vld [vmem:[#allocation5 + $0xc] sm:$0xf]
    %v89 = vld [vmem:[#allocation5 + $0x10] sm:$0xf]
    %v90 = vld [vmem:[#allocation5 + $0x14] sm:$0xf]
    %v91 = vld [vmem:[#allocation5 + $0x18] sm:$0xf]
    %v92 = vld [vmem:[#allocation5 + $0x1c] sm:$0xf]
    %v93 = vld [vmem:[%s2] sm:$0x1]
    %v95 = vlaneseq
    %v96 = vshrl.u32 %v95, 7
    %v97 = vsub.s32 0, %v96
    %v98 = vrot.slane %v93, %v97
    %v102 = vunpack.c.l.b16 %v83
    %v103 = vunpack.c.l.b16 %v84
    %v104 = vpack.c.b16 %v103, %v102
    %v113 = vunpack.c.l.b16 %v85
    %v114 = vunpack.c.l.b16 %v86
    %v115 = vunpack.c.l.b16 %v87
    %v116 = vunpack.c.l.b16 %v88
    %v117 = vunpack.c.l.b16 %v89
    %v118 = vunpack.c.l.b16 %v90
    %v119 = vunpack.c.l.b16 %v91
    %v120 = vunpack.c.l.b16 %v92
    %v121 = vpack.c.b16 %v114, %v113
    %v122 = vpack.c.b16 %v116, %v115
    %v123 = vpack.c.b16 %v118, %v117
    %v124 = vpack.c.b16 %v120, %v119
    %vm129 = vcmask 523264
    %v131 = vsel %vm129, %v104, 0
    %133 = vmatprep.subr.bf16.mxu0 0
    %134 = vmatpush1.bf16.msra.mxu0 %v121
    %135 = vmatprep.subr.bf16.mxu0 0
    %136 = vmatpush1.bf16.msra.mxu0 %v122
    %137 = vmatprep.subr.bf16.mxu0 0
    %138 = vmatpush1.bf16.msra.mxu0 %v123
    %139 = vmatprep.subr.bf16.mxu0 0
    %140 = vmatpush1.bf16.msra.mxu0 %v124
    %141 = vmatprep.subr.bf16.mxu0 0
    %142 = vmatpush1.bf16.msra.mxu0 0
    %143 = vmatprep.subr.bf16.mxu0 0
    %144 = vmatpush1.bf16.msra.mxu0 0
    %145 = vmatprep.subr.bf16.mxu0 0
    %146 = vmatpush1.bf16.msra.mxu0 0
    %147 = vmatprep.subr.bf16.mxu0 0
    %148 = vmatpush1.bf16.msra.mxu0 0
    %149 = vmatprep.subr.bf16.mxu0 0
    %150 = vmatpush1.bf16.msra.mxu0 0
    %151 = vmatprep.subr.bf16.mxu0 0
    %152 = vmatpush1.bf16.msra.mxu0 0
    %153 = vmatprep.subr.bf16.mxu0 0
    %154 = vmatpush1.bf16.msra.mxu0 0
    %155 = vmatprep.subr.bf16.mxu0 0
    %156 = vmatpush1.bf16.msra.mxu0 0
    %157 = vmatprep.subr.bf16.mxu0 0
    %158 = vmatpush1.bf16.msra.mxu0 0
    %159 = vmatprep.subr.bf16.mxu0 0
    %160 = vmatpush1.bf16.msra.mxu0 0
    %161 = vmatprep.subr.bf16.mxu0 0
    %162 = vmatpush1.bf16.msra.mxu0 0
    %163 = vmatprep.subr.bf16.mxu0 0
    %164 = vmatpush1.bf16.msra.mxu0 0
    %165 = vmatprep.mubr.bf16.mxu0 0
    %166 = vmatmul.mubr.bf16.gmra.mrb[0].mxu0 %v131
    %v167 = vpop.f32.mrb[0].mxu0
    %v168 = vadd.f32 %v98, %v167
    %v169 = vpop.f32.mrb[0].mxu0
    %v170 = vpop.f32.mrb[0].mxu0
    %v171 = vadd.f32 %v98, %v170
    %v172 = vpop.f32.mrb[0].mxu0
    %173 = vdwg.mxu0
    %v174 = vmax.f32 %v168, 0.0
    %v175 = vmax.f32 %v171, 0.0
    %v176 = vpack.c.bf16 %v175, %v174
    %v177 = vld [vmem:[#allocation7] sm:$0xf]
    %v178 = vld [vmem:[#allocation7 + $0x4] sm:$0xf]
    %v179 = vld [vmem:[#allocation7 + $0x8] sm:$0xf]
    %v180 = vld [vmem:[#allocation7 + $0xc] sm:$0xf]
    %v181 = vld [vmem:[#allocation7 + $0x10] sm:$0xf]
    %v182 = vld [vmem:[#allocation7 + $0x14] sm:$0xf]
    %v183 = vld [vmem:[#allocation7 + $0x18] sm:$0xf]
    %v184 = vld [vmem:[#allocation7 + $0x1c] sm:$0xf]
    %v185 = vld [vmem:[#allocation7 + $0x20] sm:$0xf]
    %v186 = vld [vmem:[#allocation7 + $0x24] sm:$0xf]
    %v187 = vld [vmem:[#allocation7 + $0x28] sm:$0xf]
    %v188 = vld [vmem:[#allocation7 + $0x2c] sm:$0xf]
    %v189 = vld [vmem:[#allocation7 + $0x30] sm:$0xf]
    %v190 = vld [vmem:[#allocation7 + $0x34] sm:$0xf]
    %v191 = vld [vmem:[#allocation7 + $0x38] sm:$0xf]
    %v192 = vld [vmem:[#allocation7 + $0x3c] sm:$0xf]
    %v193 = vld [vmem:[%s4] sm:$0x1]
    %v195 = vlaneseq
    %v196 = vshrl.u32 %v195, 7
    %v197 = vsub.s32 0, %v196
    %v198 = vrot.slane %v193, %v197
    %v216 = vunpack.c.l.b16 %v177
    %v217 = vunpack.c.l.b16 %v178
    %v218 = vunpack.c.l.b16 %v179
    %v219 = vunpack.c.l.b16 %v180
    %v220 = vunpack.c.l.b16 %v181
    %v221 = vunpack.c.l.b16 %v182
    %v222 = vunpack.c.l.b16 %v183
    %v223 = vunpack.c.l.b16 %v184
    %v224 = vunpack.c.l.b16 %v185
    %v225 = vunpack.c.l.b16 %v186
    %v226 = vunpack.c.l.b16 %v187
    %v227 = vunpack.c.l.b16 %v188
    %v228 = vunpack.c.l.b16 %v189
    %v229 = vunpack.c.l.b16 %v190
    %v230 = vunpack.c.l.b16 %v191
    %v231 = vunpack.c.l.b16 %v192
    %v232 = vpack.c.b16 %v217, %v216
    %v233 = vpack.c.b16 %v219, %v218
    %v234 = vpack.c.b16 %v221, %v220
    %v235 = vpack.c.b16 %v223, %v222
    %v236 = vpack.c.b16 %v225, %v224
    %v237 = vpack.c.b16 %v227, %v226
    %v238 = vpack.c.b16 %v229, %v228
    %v239 = vpack.c.b16 %v231, %v230
    %248 = vmatprep.subr.bf16.mxu0 0
    %249 = vmatpush1.bf16.msra.mxu0 %v232
    %250 = vmatprep.subr.bf16.mxu0 0
    %251 = vmatpush1.bf16.msra.mxu0 %v233
    %252 = vmatprep.subr.bf16.mxu0 0
    %253 = vmatpush1.bf16.msra.mxu0 %v234
    %254 = vmatprep.subr.bf16.mxu0 0
    %255 = vmatpush1.bf16.msra.mxu0 %v235
    %256 = vmatprep.subr.bf16.mxu0 0
    %257 = vmatpush1.bf16.msra.mxu0 %v236
    %258 = vmatprep.subr.bf16.mxu0 0
    %259 = vmatpush1.bf16.msra.mxu0 %v237
    %260 = vmatprep.subr.bf16.mxu0 0
    %261 = vmatpush1.bf16.msra.mxu0 %v238
    %262 = vmatprep.subr.bf16.mxu0 0
    %263 = vmatpush1.bf16.msra.mxu0 %v239
    %264 = vmatprep.subr.bf16.mxu0 0
    %265 = vmatpush1.bf16.msra.mxu0 0
    %266 = vmatprep.subr.bf16.mxu0 0
    %267 = vmatpush1.bf16.msra.mxu0 0
    %268 = vmatprep.subr.bf16.mxu0 0
    %269 = vmatpush1.bf16.msra.mxu0 0
    %270 = vmatprep.subr.bf16.mxu0 0
    %271 = vmatpush1.bf16.msra.mxu0 0
    %272 = vmatprep.subr.bf16.mxu0 0
    %273 = vmatpush1.bf16.msra.mxu0 0
    %274 = vmatprep.subr.bf16.mxu0 0
    %275 = vmatpush1.bf16.msra.mxu0 0
    %276 = vmatprep.subr.bf16.mxu0 0
    %277 = vmatpush1.bf16.msra.mxu0 0
    %278 = vmatprep.subr.bf16.mxu0 0
    %279 = vmatpush1.bf16.msra.mxu0 0
    %280 = vmatprep.mubr.bf16.mxu0 0
    %281 = vmatmul.mubr.bf16.gmra.mrb[0].mxu0 %v176
    %v282 = vpop.f32.mrb[0].mxu0
    %v283 = vadd.f32 %v198, %v282
    %v284 = vpop.f32.mrb[0].mxu0
    %v285 = vpop.f32.mrb[0].mxu0
    %v286 = vadd.f32 %v198, %v285
    %v287 = vpop.f32.mrb[0].mxu0
    %288 = vdwg.mxu0
    %v289 = vpack.c.bf16 %v286, %v283
    %v290 = vld [vmem:[#allocation8] sm:$0xf]
    %v291 = vld [vmem:[#allocation8 + $0x4] sm:$0xf]
    %v292 = vld [vmem:[#allocation8 + $0x8] sm:$0xf]
    %v293 = vld [vmem:[#allocation8 + $0xc] sm:$0xf]
    %v294 = vld [vmem:[#allocation8 + $0x10] sm:$0xf]
    %v295 = vld [vmem:[#allocation8 + $0x14] sm:$0xf]
    %v296 = vld [vmem:[#allocation8 + $0x18] sm:$0xf]
    %v297 = vld [vmem:[#allocation8 + $0x1c] sm:$0xf]
    %v298 = vld [vmem:[#allocation8 + $0x20] sm:$0xf]
    %v299 = vld [vmem:[#allocation8 + $0x24] sm:$0xf]
    %v300 = vld [vmem:[#allocation8 + $0x28] sm:$0xf]
    %v301 = vld [vmem:[#allocation8 + $0x2c] sm:$0xf]
    %v302 = vld [vmem:[#allocation8 + $0x30] sm:$0xf]
    %v303 = vld [vmem:[#allocation8 + $0x34] sm:$0xf]
    %v304 = vld [vmem:[#allocation8 + $0x38] sm:$0xf]
    %v305 = vld [vmem:[#allocation8 + $0x3c] sm:$0xf]
    %v306 = vld [vmem:[%s6] sm:$0x1]
    %v308 = vlaneseq
    %v309 = vshrl.u32 %v308, 7
    %v310 = vsub.s32 0, %v309
    %v311 = vrot.slane %v306, %v310
    %v329 = vunpack.c.l.b16 %v290
    %v330 = vunpack.c.l.b16 %v291
    %v331 = vunpack.c.l.b16 %v292
    %v332 = vunpack.c.l.b16 %v293
    %v333 = vunpack.c.l.b16 %v294
    %v334 = vunpack.c.l.b16 %v295
    %v335 = vunpack.c.l.b16 %v296
    %v336 = vunpack.c.l.b16 %v297
    %v337 = vunpack.c.l.b16 %v298
    %v338 = vunpack.c.l.b16 %v299
    %v339 = vunpack.c.l.b16 %v300
    %v340 = vunpack.c.l.b16 %v301
    %v341 = vunpack.c.l.b16 %v302
    %v342 = vunpack.c.l.b16 %v303
    %v343 = vunpack.c.l.b16 %v304
    %v344 = vunpack.c.l.b16 %v305
    %v345 = vpack.c.b16 %v330, %v329
    %v346 = vpack.c.b16 %v332, %v331
    %v347 = vpack.c.b16 %v334, %v333
    %v348 = vpack.c.b16 %v336, %v335
    %v349 = vpack.c.b16 %v338, %v337
    %v350 = vpack.c.b16 %v340, %v339
    %v351 = vpack.c.b16 %v342, %v341
    %v352 = vpack.c.b16 %v344, %v343
    %361 = vmatprep.subr.bf16.mxu0 0
    %362 = vmatpush1.bf16.msra.mxu0 %v345
    %363 = vmatprep.subr.bf16.mxu0 0
    %364 = vmatpush1.bf16.msra.mxu0 %v346
    %365 = vmatprep.subr.bf16.mxu0 0
    %366 = vmatpush1.bf16.msra.mxu0 %v347
    %367 = vmatprep.subr.bf16.mxu0 0
    %368 = vmatpush1.bf16.msra.mxu0 %v348
    %369 = vmatprep.subr.bf16.mxu0 0
    %370 = vmatpush1.bf16.msra.mxu0 %v349
    %371 = vmatprep.subr.bf16.mxu0 0
    %372 = vmatpush1.bf16.msra.mxu0 %v350
    %373 = vmatprep.subr.bf16.mxu0 0
    %374 = vmatpush1.bf16.msra.mxu0 %v351
    %375 = vmatprep.subr.bf16.mxu0 0
    %376 = vmatpush1.bf16.msra.mxu0 %v352
    %377 = vmatprep.subr.bf16.mxu0 0
    %378 = vmatpush1.bf16.msra.mxu0 0
    %379 = vmatprep.subr.bf16.mxu0 0
    %380 = vmatpush1.bf16.msra.mxu0 0
    %381 = vmatprep.subr.bf16.mxu0 0
    %382 = vmatpush1.bf16.msra.mxu0 0
    %383 = vmatprep.subr.bf16.mxu0 0
    %384 = vmatpush1.bf16.msra.mxu0 0
    %385 = vmatprep.subr.bf16.mxu0 0
    %386 = vmatpush1.bf16.msra.mxu0 0
    %387 = vmatprep.subr.bf16.mxu0 0
    %388 = vmatpush1.bf16.msra.mxu0 0
    %389 = vmatprep.subr.bf16.mxu0 0
    %390 = vmatpush1.bf16.msra.mxu0 0
    %391 = vmatprep.subr.bf16.mxu0 0
    %392 = vmatpush1.bf16.msra.mxu0 0
    %393 = vmatprep.mubr.bf16.mxu0 0
    %394 = vmatmul.mubr.bf16.gmra.mrb[0].mxu0 %v289
    %v395 = vpop.f32.mrb[0].mxu0
    %v396 = vadd.f32 %v311, %v395
    %v397 = vpop.f32.mrb[0].mxu0
    %v398 = vpop.f32.mrb[0].mxu0
    %v399 = vadd.f32 %v311, %v398
    %v400 = vpop.f32.mrb[0].mxu0
    %401 = vdwg.mxu0
    %v402 = vlaneseq
    %v403 = vand.u32 %v402, 127
    %vm404 = vcmp.ge.s32.totalorder %v403, 32
    %vm405 = vcmp.lt.s32.totalorder %v403, 40
    %vm406 = vmand %vm404, %vm405
    %v407 = vsel %vm406, %v396, -1e+30
    %v408 = vsel %vm406, %v399, -1e+30
    %409 = vmax.xlane.f32.xlu0 %v407
    %v410 = vpop.xlane.xlu0 %409
    %411 = vmax.xlane.f32.xlu0 %v408
    %v412 = vpop.xlane.xlu0 %411
    %v413 = vsub.f32 %v407, %v410
    %v414 = vsub.f32 %v408, %v412
    %v415 = vmul.f32 %v413, 1.442695
    %v416 = vpow.pop %v415
    %v417 = vmul.f32 %v414, 1.442695
    %v418 = vpow.pop %v417
    %419 = vadd.xlane.f32.xlu0 %v416
    %v420 = vpop.xlane.xlu0 %419
    %421 = vadd.xlane.f32.xlu0 %v418
    %v422 = vpop.xlane.xlu0 %421
    %v423 = vlog2.pop %v420
    %v424 = vmul.f32 %v423, 0.6931472
    %v425 = vlog2.pop %v422
    %v426 = vmul.f32 %v425, 0.6931472
    %v427 = vsub.f32 %v413, %v424
    %v428 = vsub.f32 %v414, %v426
    %vm429 = vcmp.lt.s32.totalorder %v403, 32
    %v430 = vsel %vm429, %v283, %v427
    %v431 = vsel %vm429, %v286, %v428
    %432 = vst [vmem:[#allocation10] sm:$0xff] %v430
    %433 = vst [vmem:[#allocation10 + $0x8] sm:$0xff] %v431
    // Predicated region
    $region46: #{tpu_custom_call.1} parent=1 // pred_check
      _
    $region47: #{tpu_custom_call.1} parent=1 // pred_check_branch
      %435 = sbr.rel (0) target = $region49
    $region48: #{tpu_custom_call.1} parent=1 // pred_region
      %s437 = ssub.s32 256, 256
      %438 = vsyncadd [#allocation4], %s437
      %s439 = sshll.u32 [#allocation10], 4
      %s440 = int_to_ptr.vmem [resolvable:$true] %s439
      %445 = dma.vmem_to_hbm [thread:$0]  %s440, 256, %s7, [#allocation4], 128, 128, 8
    $region49: #{tpu_custom_call.1} parent=1 // pred_fallthru
      _
    // Predicated region
    $region50: #{tpu_custom_call.1} parent=1 // pred_check
      _
    $region51: #{tpu_custom_call.1} parent=1 // pred_check_branch
      %447 = sbr.rel (0) target = $region53
    $region52: #{tpu_custom_call.1} parent=1 // pred_region
      %448 = dma.done [#allocation4], 256
    $region53: #{tpu_custom_call.1} parent=1 // pred_fallthru
      _
    %449 = vsyncpa [#allocation3], 1
    %450 = vsyncpa [#allocation6], 1
    %451 = vsyncpa [#allocation9], 1
    %452 = vsyncpa [#allocation4], 1

</llo_original>
